<compile_context>
chip_gen: v7x
topology: tpu7x:2x2x1
jax: 0.10.0
libtpu: 0.0.40
codegen_flags: <defaults>
</compile_context>

<pallas_src>
import jax
import jax.numpy as jnp
from jax import lax
from jax.experimental import pallas as pl
from jax.experimental.pallas import tpu as pltpu


def _round_up(n, m):
    return ((n + m - 1) // m) * m


def _vmem_capacity_bytes():
    try:
        return int(pltpu.get_tpu_info().vmem_capacity_bytes)
    except Exception:
        return 64 << 20  # conservative fallback: v7x per-TensorCore VMEM


# ----------------------------------------------------------------------------
# Kernel
# ----------------------------------------------------------------------------
def _make_kernel(cblk, opad, w_base_from_grid, unroll):
    def kernel(x_ref, w_ref, o_ref, acc_ref):
        # x_ref  : (cblk, tm, D)   channel block of one batch's rows
        # w_ref  : (Cw,   D,  Np)  weight (fully resident, or per-channel-block)
        # o_ref  : (opad, tm)      output tile in [O, D] layout (lane = rows)
        # acc_ref: (tm,   Np) f32  accumulator across the channel reduction
        cb = pl.program_id(2)

        @pl.when(cb == 0)
        def _init():
            acc_ref[...] = jnp.zeros_like(acc_ref)

        base = cb * cblk if w_base_from_grid else 0

        def body(c, acc):
            return acc + jnp.dot(
                x_ref[c], w_ref[base + c], preferred_element_type=jnp.float32
            )

        acc_ref[...] = lax.fori_loop(0, cblk, body, acc_ref[...], unroll=unroll)

        @pl.when(cb == pl.num_programs(2) - 1)
        def _fin():
            # One XLU transpose per output tile (off the HBM critical path),
            # then store only the useful (sublane-padded) output channels.
            o_ref[...] = acc_ref[...].T[:opad, :].astype(o_ref.dtype)

    return kernel


# ----------------------------------------------------------------------------
# pallas_call wrapper (tiling / VMEM budgeting)
# ----------------------------------------------------------------------------
def _tiled_forward(x, wk, opad):
    B, C, D, _ = x.shape
    Np = wk.shape[-1]
    x_item = jnp.dtype(x.dtype).itemsize

    cap = _vmem_capacity_bytes()
    usable = min(int(cap * 0.75), 100 << 20)   # leave headroom under physical
    budget = min(int(cap * 0.6), usable)       # budget for pipelined blocks

    # Weight residency: hold the whole [C, D, Np] weight in VMEM when it fits
    # comfortably (constant index_map -> fetched once, never re-DMA'd).
    w_full_bytes = 2 * C * D * Np * 4
    w_resident = w_full_bytes <= budget // 2

    def need(cblk, tm_):
        xb = 2 * cblk * tm_ * D * x_item                 # double-buffered x
        wb = w_full_bytes if w_resident else 2 * cblk * D * Np * 4
        ob = 2 * opad * tm_ * 4                          # double-buffered out
        ab = tm_ * Np * 4                                # accumulator scratch
        return xb + wb + ob + ab

    # Row tile: full D when small, otherwise a 128-multiple (lane-dense output
    # stores; partial last tile is safe, see invariant in the header comment).
    tm = D if D <= 512 else 512
    # v7x: 2 TensorCores shard the "parallel" grid axes -> with B == 1 make
    # sure there are >= 2 row tiles (one extra step is free on v5e/v6e).
    if B == 1 and D >= 256 and pl.cdiv(D, tm) == 1:
        tm = _round_up(pl.cdiv(D, 2), 128)
    while need(1, tm) > budget and tm > 128:
        tm = max(128, _round_up(tm // 2, 128))
    nr = pl.cdiv(D, tm)

    # Largest channel block that (a) divides C exactly (no garbage channels in
    # the reduction) and (b) fits the VMEM budget.
    cblk = 1
    for d in range(1, C + 1):
        if C % d == 0 and need(d, tm) <= budget:
            cblk = d
    ncb = C // cblk

    kernel = _make_kernel(cblk, opad, w_base_from_grid=w_resident,
                          unroll=(cblk <= 8))

    if w_resident:
        w_spec = pl.BlockSpec((C, D, Np), lambda b, i, cb: (0, 0, 0))
    else:
        w_spec = pl.BlockSpec((cblk, D, Np), lambda b, i, cb: (cb, 0, 0))

    vmem_limit = int(min(max(need(cblk, tm) + (8 << 20), 32 << 20), usable))

    grid_spec = pltpu.PrefetchScalarGridSpec(
        num_scalar_prefetch=0,
        grid=(B, nr, ncb),
        in_specs=[
            pl.BlockSpec((pl.Squeezed(), cblk, tm, D),
                         lambda b, i, cb: (b, cb, i, 0)),
            w_spec,
        ],
        out_specs=pl.BlockSpec((pl.Squeezed(), opad, tm),
                               lambda b, i, cb: (b, 0, i)),
        scratch_shapes=[pltpu.VMEM((tm, Np), jnp.float32)],
    )

    return pl.pallas_call(
        kernel,
        out_shape=jax.ShapeDtypeStruct((B, opad, D), jnp.float32),
        grid_spec=grid_spec,
        compiler_params=pltpu.CompilerParams(
            dimension_semantics=("parallel", "parallel", "arbitrary"),
            vmem_limit_bytes=vmem_limit,
        ),
    )(x, wk)


# ----------------------------------------------------------------------------
# Public forward
# ----------------------------------------------------------------------------
@jax.jit
def vectorizer_forward(x, X):
    """x: [B, C_in, D, D], X: [C_out, C_in, D] -> [B, C_out, D] (float32)."""
    B, C, H, D = x.shape
    O, C2, D2 = X.shape
    assert C == C2 and D == D2 and H == D

    # TODO(synk): no f64 on the TPU MXU; non-MXU-friendly dtypes fall back to
    #             f32 streaming.  bf16/f16/f32 inputs are streamed natively.
    if x.dtype not in (jnp.dtype(jnp.float32), jnp.dtype(jnp.bfloat16),
                       jnp.dtype(jnp.float16)):
        x = x.astype(jnp.float32)
    Xf = X.astype(jnp.float32)

    Np = _round_up(max(O, 1), 128)   # MXU N (lane) padding for the dot
    Opad = _round_up(max(O, 1), 8)   # sublane padding of stored channels

    # Weight relayout + padding (weight-sized, one-time): [O,C,D] -> [C,D,Np].
    wk = jnp.transpose(Xf, (1, 2, 0))
    if Np != O:
        wk = jnp.pad(wk, ((0, 0), (0, 0), (0, Np - O)))

    out = _tiled_forward(x, wk, Opad)          # [B, Opad, D], already O-major
    if Opad != O:
        out = out[:, :O, :]
    return out


def _reference_forward(x, X):
    # Pure-JAX reference of the same contraction (full f32 precision).
    return jnp.einsum("bcij,ocj->boi",
                      x.astype(jnp.float32), X.astype(jnp.float32),
                      precision=jax.lax.Precision.HIGHEST)


if __name__ == "__main__":
    key = jax.random.PRNGKey(0)
    k_x, k_p, k_x2, k_p2 = jax.random.split(key, 4)

    # --- module-consistent tiny shapes ---------------------------------------
    B, C_in, D, C_out = 2, 4, 16, 8
    c = 0.5
    x = jax.random.normal(k_x, (B, C_in, D, D), dtype=jnp.float32)
    X = 1.0 - c * jax.random.uniform(k_p, (C_out, C_in, D), dtype=jnp.float32)

    out = jax.block_until_ready(vectorizer_forward(x, X))
    ref = _reference_forward(x, X)
    assert out.shape == (B, C_out, D), out.shape
    assert jnp.allclose(out, ref, rtol=1e-5, atol=1e-5), "mismatch (small shapes)"

    # --- larger shapes: exercises row tiling (partial last tile), in-kernel
    #     channel reduction, resident weight, and in-kernel output transpose --
    B2, C2, D2, O2 = 2, 8, 640, 24
    x2 = jax.random.normal(k_x2, (B2, C2, D2, D2), dtype=jnp.float32)
    X2 = 1.0 - c * jax.random.uniform(k_p2, (O2, C2, D2), dtype=jnp.float32)

    out2 = jax.block_until_ready(vectorizer_forward(x2, X2))
    ref2 = _reference_forward(x2, X2)
    assert out2.shape == (B2, O2, D2), out2.shape
    assert jnp.allclose(out2, ref2, rtol=2e-3, atol=2e-2), "mismatch (tiled shapes)"

    print("KERNEL_OK")
</pallas_src>

<mosaic_0001>
module attributes {stable_mosaic.version = 11 : i64} {
  func.func @kernel(%arg0: i32, %arg1: i32, %arg2: i32, %arg3: memref<1x4x16x16xf32, #tpu.memory_space<vmem>>, %arg4: memref<4x16x128xf32, #tpu.memory_space<vmem>>, %arg5: memref<1x8x16xf32, #tpu.memory_space<vmem>>, %arg6: memref<16x128xf32, #tpu.memory_space<vmem>>) attributes {dimension_semantics = [#tpu.dimension_semantics<parallel>, #tpu.dimension_semantics<parallel>, #tpu.dimension_semantics<arbitrary>], iteration_bounds = array<i64: 2, 1, 1>, scalar_prefetch = 0 : i64, scratch_operands = 1 : i64, tpu.core_type = #tpu.core_type<tc>, window_params = [{transform_indices = @transform_0, window_bounds = array<i64: 1, 4, 16, 16>}, {pipeline_mode = #tpu.pipeline_mode<synchronous>, transform_indices = @transform_1, window_bounds = array<i64: 4, 16, 128>}, {transform_indices = @transform_2, window_bounds = array<i64: 1, 8, 16>}]} {
    %c0_i32 = arith.constant 0 : i32
    %0 = arith.cmpi eq, %arg2, %c0_i32 : i32
    %1 = arith.extui %0 : i1 to i32
    %c0_i32_0 = arith.constant 0 : i32
    %2 = arith.cmpi ne, %1, %c0_i32_0 : i32
    scf.if %2 {
      %cst_31 = arith.constant 0.000000e+00 : f32
      %45 = vector.broadcast %cst_31 : f32 to vector<16x128xf32>
      %c0_32 = arith.constant 0 : index
      %c0_33 = arith.constant 0 : index
      %46 = vector.load %arg6[%c0_32, %c0_33] : memref<16x128xf32, #tpu.memory_space<vmem>>, vector<16x128xf32>
      tpu.vector_store %arg6[%c0_32, %c0_33], %45 {strides = array<i32>} : memref<16x128xf32, #tpu.memory_space<vmem>>, vector<16x128xf32>,
    } else {
    }
    %c4_i32 = arith.constant 4 : i32
    %3 = arith.muli %arg2, %c4_i32 : i32
    %c0 = arith.constant 0 : index
    %c0_1 = arith.constant 0 : index
    %4 = vector.load %arg6[%c0, %c0_1] : memref<16x128xf32, #tpu.memory_space<vmem>>, vector<16x128xf32>
    %c0_i32_2 = arith.constant 0 : i32
    %c0_3 = arith.constant 0 : index
    %5 = arith.index_cast %c0_i32_2 : i32 to index
    %c0_4 = arith.constant 0 : index
    %c0_5 = arith.constant 0 : index
    %6 = vector.load %arg3[%c0_3, %5, %c0_4, %c0_5] : memref<1x4x16x16xf32, #tpu.memory_space<vmem>>, vector<1x1x16x16xf32>
    %7 = vector.shape_cast %6 : vector<1x1x16x16xf32> to vector<16x16xf32>
    %8 = arith.addi %3, %c0_i32_2 : i32
    %9 = arith.index_cast %8 : i32 to index
    %c0_6 = arith.constant 0 : index
    %c0_7 = arith.constant 0 : index
    %10 = vector.load %arg4[%9, %c0_6, %c0_7] : memref<4x16x128xf32, #tpu.memory_space<vmem>>, vector<1x16x128xf32>
    %11 = vector.shape_cast %10 : vector<1x16x128xf32> to vector<16x128xf32>
    %cst = arith.constant dense<0.000000e+00> : vector<16x128xf32>
    %12 = tpu.matmul %7, %11, %cst {dimension_numbers = #tpu.dot_dimension_numbers<[1], [0], [0], [1], [0, 0, 1, 1], [], []>} : vector<16x16xf32>, vector<16x128xf32>, vector<16x128xf32> -> vector<16x128xf32>
    %13 = arith.addf %4, %12 : vector<16x128xf32>
    %c1_i32 = arith.constant 1 : i32
    %c0_8 = arith.constant 0 : index
    %14 = arith.index_cast %c1_i32 : i32 to index
    %c0_9 = arith.constant 0 : index
    %c0_10 = arith.constant 0 : index
    %15 = vector.load %arg3[%c0_8, %14, %c0_9, %c0_10] : memref<1x4x16x16xf32, #tpu.memory_space<vmem>>, vector<1x1x16x16xf32>
    %16 = vector.shape_cast %15 : vector<1x1x16x16xf32> to vector<16x16xf32>
    %17 = arith.addi %3, %c1_i32 : i32
    %18 = arith.index_cast %17 : i32 to index
    %c0_11 = arith.constant 0 : index
    %c0_12 = arith.constant 0 : index
    %19 = vector.load %arg4[%18, %c0_11, %c0_12] : memref<4x16x128xf32, #tpu.memory_space<vmem>>, vector<1x16x128xf32>
    %20 = vector.shape_cast %19 : vector<1x16x128xf32> to vector<16x128xf32>
    %cst_13 = arith.constant dense<0.000000e+00> : vector<16x128xf32>
    %21 = tpu.matmul %16, %20, %cst_13 {dimension_numbers = #tpu.dot_dimension_numbers<[1], [0], [0], [1], [0, 0, 1, 1], [], []>} : vector<16x16xf32>, vector<16x128xf32>, vector<16x128xf32> -> vector<16x128xf32>
    %22 = arith.addf %13, %21 : vector<16x128xf32>
    %c2_i32 = arith.constant 2 : i32
    %c0_14 = arith.constant 0 : index
    %23 = arith.index_cast %c2_i32 : i32 to index
    %c0_15 = arith.constant 0 : index
    %c0_16 = arith.constant 0 : index
    %24 = vector.load %arg3[%c0_14, %23, %c0_15, %c0_16] : memref<1x4x16x16xf32, #tpu.memory_space<vmem>>, vector<1x1x16x16xf32>
    %25 = vector.shape_cast %24 : vector<1x1x16x16xf32> to vector<16x16xf32>
    %26 = arith.addi %3, %c2_i32 : i32
    %27 = arith.index_cast %26 : i32 to index
    %c0_17 = arith.constant 0 : index
    %c0_18 = arith.constant 0 : index
    %28 = vector.load %arg4[%27, %c0_17, %c0_18] : memref<4x16x128xf32, #tpu.memory_space<vmem>>, vector<1x16x128xf32>
    %29 = vector.shape_cast %28 : vector<1x16x128xf32> to vector<16x128xf32>
    %cst_19 = arith.constant dense<0.000000e+00> : vector<16x128xf32>
    %30 = tpu.matmul %25, %29, %cst_19 {dimension_numbers = #tpu.dot_dimension_numbers<[1], [0], [0], [1], [0, 0, 1, 1], [], []>} : vector<16x16xf32>, vector<16x128xf32>, vector<16x128xf32> -> vector<16x128xf32>
    %31 = arith.addf %22, %30 : vector<16x128xf32>
    %c3_i32 = arith.constant 3 : i32
    %c0_20 = arith.constant 0 : index
    %32 = arith.index_cast %c3_i32 : i32 to index
    %c0_21 = arith.constant 0 : index
    %c0_22 = arith.constant 0 : index
    %33 = vector.load %arg3[%c0_20, %32, %c0_21, %c0_22] : memref<1x4x16x16xf32, #tpu.memory_space<vmem>>, vector<1x1x16x16xf32>
    %34 = vector.shape_cast %33 : vector<1x1x16x16xf32> to vector<16x16xf32>
    %35 = arith.addi %3, %c3_i32 : i32
    %36 = arith.index_cast %35 : i32 to index
    %c0_23 = arith.constant 0 : index
    %c0_24 = arith.constant 0 : index
    %37 = vector.load %arg4[%36, %c0_23, %c0_24] : memref<4x16x128xf32, #tpu.memory_space<vmem>>, vector<1x16x128xf32>
    %38 = vector.shape_cast %37 : vector<1x16x128xf32> to vector<16x128xf32>
    %cst_25 = arith.constant dense<0.000000e+00> : vector<16x128xf32>
    %39 = tpu.matmul %34, %38, %cst_25 {dimension_numbers = #tpu.dot_dimension_numbers<[1], [0], [0], [1], [0, 0, 1, 1], [], []>} : vector<16x16xf32>, vector<16x128xf32>, vector<16x128xf32> -> vector<16x128xf32>
    %40 = arith.addf %31, %39 : vector<16x128xf32>
    %c4_i32_26 = arith.constant 4 : i32
    %c0_27 = arith.constant 0 : index
    %c0_28 = arith.constant 0 : index
    %41 = vector.load %arg6[%c0_27, %c0_28] : memref<16x128xf32, #tpu.memory_space<vmem>>, vector<16x128xf32>
    tpu.vector_store %arg6[%c0_27, %c0_28], %40 {strides = array<i32>} : memref<16x128xf32, #tpu.memory_space<vmem>>, vector<16x128xf32>,
    %c0_i32_29 = arith.constant 0 : i32
    %42 = arith.cmpi eq, %arg2, %c0_i32_29 : i32
    %43 = arith.extui %42 : i1 to i32
    %c0_i32_30 = arith.constant 0 : i32
    %44 = arith.cmpi ne, %43, %c0_i32_30 : i32
    scf.if %44 {
      %c0_31 = arith.constant 0 : index
      %c0_32 = arith.constant 0 : index
      %45 = vector.load %arg6[%c0_31, %c0_32] : memref<16x128xf32, #tpu.memory_space<vmem>>, vector<16x128xf32>
      %46 = tpu.transpose %45, [1, 0] : vector<16x128xf32> -> vector<128x16xf32>
      %47 = vector.extract_strided_slice %46 {offsets = [0, 0], sizes = [8, 16], strides = [1, 1]} : vector<128x16xf32> to vector<8x16xf32>
      %c0_33 = arith.constant 0 : index
      %c0_34 = arith.constant 0 : index
      %c0_35 = arith.constant 0 : index
      %48 = vector.load %arg5[%c0_33, %c0_34, %c0_35] : memref<1x8x16xf32, #tpu.memory_space<vmem>>, vector<1x8x16xf32>
      %49 = vector.shape_cast %48 : vector<1x8x16xf32> to vector<8x16xf32>
      %50 = vector.shape_cast %47 : vector<8x16xf32> to vector<1x8x16xf32>
      tpu.vector_store %arg5[%c0_33, %c0_34, %c0_35], %50 {strides = array<i32>} : memref<1x8x16xf32, #tpu.memory_space<vmem>>, vector<1x8x16xf32>,
    } else {
    }
    return
  }
  func.func @transform_0(%arg0: i32, %arg1: i32, %arg2: i32) -> (i32, i32, i32, i32) {
    %c0_i32 = arith.constant 0 : i32
    %c0_i32_0 = arith.constant 0 : i32
    return %arg0, %arg2, %arg1, %c0_i32 : i32, i32, i32, i32
  }
  func.func @transform_1(%arg0: i32, %arg1: i32, %arg2: i32) -> (i32, i32, i32) {
    %c0_i32 = arith.constant 0 : i32
    %c0_i32_0 = arith.constant 0 : i32
    %c0_i32_1 = arith.constant 0 : i32
    %c0_i32_2 = arith.constant 0 : i32
    return %c0_i32, %c0_i32_0, %c0_i32_1 : i32, i32, i32
  }
  func.func @transform_2(%arg0: i32, %arg1: i32, %arg2: i32) -> (i32, i32, i32) {
    %c0_i32 = arith.constant 0 : i32
    %c0_i32_0 = arith.constant 0 : i32
    return %arg0, %c0_i32, %arg1 : i32, i32, i32
  }
}

</mosaic_0001>

<llo_original>
// kernel: vectorizer_forward.1
$region0: #{vectorizer_forward.1}
  #allocation0 [shape = 'u32[]', space=smem, size = 0x4, offset = 0x4, fixed_abs, tag = 'smem constant byte address 0x4 - core index']
  #allocation1 [shape = 'u32[144,128]{1,0:T(1,128)}', space=vmem, size = 0x12000, scoped, tag = 'internal scratch']
  #allocation2 [shape = 'f32[16,128]{1,0:T(8,128)}', space=vmem, size = 0x2000, scoped, tag = 'scratch operand']
  %s0 = inlined_call_operand.vmem [shape: f32[2,4,16,16], index: 0, kind: input, shape index: {}]
  %s1 = inlined_call_operand.vmem [shape: f32[4,16,128], index: 1, kind: input, shape index: {}]
  %s2 = inlined_call_operand.hbm [shape: f32[2,8,16], index: 2, kind: output, shape index: {}]
  %s3 = sld [smem:[#allocation0]]
  $region49: #{vectorizer_forward.1} parent=0
    _
  %s5 = ssub.s32 1, %s3
  %s6 = scalar_select 0, %s5, %s3
  $region1: #{vectorizer_forward.1} parent=0
    #allocation3 [shape = 'u8[8192]{0}', space=vmem, size = 0x2000, scoped, tag = 'output window, operand 0']
    #allocation4 [shape = 's32[2]{0}', space=sflag, size = 0x8, scoped, tag = 'scoped memory for vectorizer_forward.1']
    %7 = vsyncpa [#allocation4], 0
    %s8 = scalar_lea.sflag [#allocation4], 1
    %9 = vsyncpa %s8, 0
    loop: start=0, step=1, limit=4
    $region2: #{vectorizer_forward.1} parent=1 // loop_pre_header
      _
    $region3: #{vectorizer_forward.1} parent=1 // loop_header
      %s11 = sphi 0, %s15
      %p12 = scmp.ge.s32.totalorder %s11, 4
      %s18 = sphi 0, %s37
      %s19 = sphi 0, %s33
      %s20 = sphi 0, %s29
      %s21 = sphi 0, %s18
      %s22 = sphi 0, %s19
      %s23 = sphi 0, %s20
      %s24 = sphi 0, %s21
      %s25 = sphi 0, %s22
      %s26 = sphi 0, %s23
      %s44 = sphi 0, %s46
      %s47 = sphi 0, %s44
      %s48 = sphi 0, %s47
      %s64 = sphi 0, %s48
      %s68 = sphi 0, %s68
      %s70 = sphi 0, %s68
      %s71 = sphi 0, %s70
      %s85 = sphi 0, %s71
      %s93 = sphi 0, %s95
      %s96 = sphi 0, %s93
      %s97 = sphi 0, %s96
      %s113 = sphi 0, %s97
    $region4: #{vectorizer_forward.1} parent=1 // loop_header_branch
      %14 = sbr.rel (%p12) target = $region8
    $region5: #{vectorizer_forward.1} parent=1 // loop_body
      %s16 = ssub.s32 %s11, 1
      %s17 = ssub.s32 %s11, 2
      %s27 = sadd.s32 1, %s20
      %p28 = scmp.ge.s32.totalorder %s27, 1
      %s29 = scalar_select %p28, 0, %s27
      %s30 = sadd.s32 1, %s19
      %s31 = scalar_select %p28, %s30, %s19
      %p32 = scmp.ge.s32.totalorder %s31, 1
      %s33 = scalar_select %p32, 0, %s31
      %s34 = sadd.s32 1, %s18
      %s35 = scalar_select %p32, %s34, %s18
      %p36 = scmp.ge.s32.totalorder %s35, 2
      %s37 = scalar_select %p36, 0, %s35
      %s38 = ssub.s32 %s18, %s37
      %s39 = ssub.s32 %s20, %s29
      %s40 = sor.u32 %s38, %s39
      %s41 = ssub.s32 %s19, %s33
      %s42 = sor.u32 %s40, %s41
      %p43 = scmp.eq.s32.totalorder %s42, 0
      %s45 = sadd.s32 %s44, 1
      %s46 = scalar_select %p43, %s44, %s45
      %p49 = pneg %p43
      %p50 = scmp.eq.s32.totalorder %s11, 1
      %p51 = por %p49, %p50
      %p52 = scmp.ne.s32.totalorder %s44, %s47
      %p53 = scmp.eq.s32.totalorder %s11, 0
      %p54 = por %p52, %p53
      %p55 = scmp.ne.s32.totalorder %s44, %s47
      %p56 = scmp.eq.s32.totalorder %s16, 1
      %p57 = por %p55, %p56
      %p58 = scmp.ne.s32.totalorder %s47, %s48
      %p59 = scmp.eq.s32.totalorder %s16, 0
      %p60 = por %p58, %p59
      %p61 = scmp.ne.s32.totalorder %s47, %s48
      %p62 = scmp.eq.s32.totalorder %s17, 1
      %p63 = por %p61, %p62
      %p65 = scmp.ne.s32.totalorder %s48, %s64
      %p66 = scmp.eq.s32.totalorder %s17, 0
      %p67 = por %p65, %p66
      %s69 = sadd.s32 %s68, 1
      %p72 = scmp.eq.s32.totalorder %s11, 1
      %p73 = scmp.ne.s32.totalorder %s68, %s70
      %p74 = scmp.eq.s32.totalorder %s11, 0
      %p75 = por %p73, %p74
      %p76 = scmp.ne.s32.totalorder %s68, %s70
      %p77 = scmp.eq.s32.totalorder %s16, 1
      %p78 = por %p76, %p77
      %p79 = scmp.ne.s32.totalorder %s70, %s71
      %p80 = scmp.eq.s32.totalorder %s16, 0
      %p81 = por %p79, %p80
      %p82 = scmp.ne.s32.totalorder %s70, %s71
      %p83 = scmp.eq.s32.totalorder %s17, 1
      %p84 = por %p82, %p83
      %p86 = scmp.ne.s32.totalorder %s71, %s85
      %p87 = scmp.eq.s32.totalorder %s17, 0
      %p88 = por %p86, %p87
      %s89 = ssub.s32 %s18, %s37
      %s90 = ssub.s32 %s19, %s33
      %s91 = sor.u32 %s89, %s90
      %p92 = scmp.eq.s32.totalorder %s91, 0
      %s94 = sadd.s32 %s93, 1
      %s95 = scalar_select %p92, %s93, %s94
      %p98 = pneg %p92
      %p99 = scmp.eq.s32.totalorder %s11, 1
      %p100 = por %p98, %p99
      %p101 = scmp.ne.s32.totalorder %s93, %s96
      %p102 = scmp.eq.s32.totalorder %s11, 0
      %p103 = por %p101, %p102
      %p104 = scmp.ne.s32.totalorder %s93, %s96
      %p105 = scmp.eq.s32.totalorder %s16, 1
      %p106 = por %p104, %p105
      %p107 = scmp.ne.s32.totalorder %s96, %s97
      %p108 = scmp.eq.s32.totalorder %s16, 0
      %p109 = por %p107, %p108
      %p110 = scmp.ne.s32.totalorder %s96, %s97
      %p111 = scmp.eq.s32.totalorder %s17, 1
      %p112 = por %p110, %p111
      %p114 = scmp.ne.s32.totalorder %s97, %s113
      %p115 = scmp.eq.s32.totalorder %s17, 0
      %p116 = por %p114, %p115
      %p117 = scmp.le.s32.totalorder 1, %s11
      %p118 = scmp.lt.s32.totalorder %s11, 3
      %p119 = pnand %p117, %p118
      %p120 = pneg %p119
      // Predicated region
      $region9: #{vectorizer_forward.1} parent=5 // pred_check
        _
      $region10: #{vectorizer_forward.1} parent=5 // pred_check_branch
        %122 = sbr.rel (%p119) target = $region12
      $region11: #{vectorizer_forward.1} parent=5 // pred_region
        %s123 = ssub.s32 %s11, 1
        // Predicated region
        $region13: #{vectorizer_forward.1} parent=11 // pred_check
          %p124 = pneg %p81
        $region14: #{vectorizer_forward.1} parent=11 // pred_check_branch
          %126 = sbr.rel (%p124) target = $region16
        $region15: #{vectorizer_forward.1} parent=11 // pred_region
          _
        $region16: #{vectorizer_forward.1} parent=11 // pred_fallthru
          _
      $region12: #{vectorizer_forward.1} parent=5 // pred_fallthru
        _
      %p127 = scmp.lt.s32.totalorder %s11, 2
      // Predicated region
      $region17: #{vectorizer_forward.1} parent=5 // pred_check
        %p128 = pneg %p127
      $region18: #{vectorizer_forward.1} parent=5 // pred_check_branch
        %130 = sbr.rel (%p128) target = $region20
      $region19: #{vectorizer_forward.1} parent=5 // pred_region
        // Predicated region
        $region21: #{vectorizer_forward.1} parent=19 // pred_check
          %p131 = pneg %p54
        $region22: #{vectorizer_forward.1} parent=19 // pred_check_branch
          %133 = sbr.rel (%p131) target = $region24
        $region23: #{vectorizer_forward.1} parent=19 // pred_region
          %s134 = smul.u32 4, %s20
          %s135 = smul.u32 2, %s19
          %p136 = scmp.lt.s32.totalorder %s18, 1
          %s137 = scalar_select %p136, %s18, 1
          %p138 = scmp.lt.s32.totalorder %s134, 3
          %s139 = scalar_select %p138, %s134, 3
          %p140 = scmp.lt.s32.totalorder %s135, 1
          %s141 = scalar_select %p140, %s135, 1
          %s142 = smul.addr %s139, 2
          %s143 = sadd.s32 %s141, %s142
          %s144 = smul.addr %s137, 8
          %s145 = sadd.s32 %s143, %s144
          %s146 = smul.addr %s145, 8
          %s147 = scalar_lea.vmem %s0, %s146
          %s148 = smul.u32 4, %s20
          %s149 = smul.u32 2, %s19
        $region24: #{vectorizer_forward.1} parent=19 // pred_fallthru
          _
      $region20: #{vectorizer_forward.1} parent=5 // pred_fallthru
        _
      %p150 = scmp.le.s32.totalorder 1, %s11
      %p151 = scmp.lt.s32.totalorder %s11, 3
      %p152 = pnand %p150, %p151
      %p153 = pneg %p152
      // Predicated region
      $region25: #{vectorizer_forward.1} parent=5 // pred_check
        _
      $region26: #{vectorizer_forward.1} parent=5 // pred_check_branch
        %155 = sbr.rel (%p152) target = $region28
      $region27: #{vectorizer_forward.1} parent=5 // pred_region
        %s156 = ssub.s32 %s11, 1
        %s157 = smul.u32 4, %s23
        %s158 = smul.u32 2, %s22
        %p159 = scmp.lt.s32.totalorder %s21, 1
        %s160 = scalar_select %p159, %s21, 1
        %p161 = scmp.lt.s32.totalorder %s157, 3
        %s162 = scalar_select %p161, %s157, 3
        %p163 = scmp.lt.s32.totalorder %s158, 1
        %s164 = scalar_select %p163, %s158, 1
        %s165 = smul.addr %s162, 2
        %s166 = sadd.s32 %s164, %s165
        %s167 = smul.addr %s160, 8
        %s168 = sadd.s32 %s166, %s167
        %s169 = smul.addr %s168, 8
        %s170 = scalar_lea.vmem %s0, %s169
        %p171 = pneg %p60
        %p172 = pneg %p57
        %p173 = pneg %p81
        %p174 = pneg %p78
        %p175 = pneg %p109
        %p176 = pneg %p106
        %s177 = sand.u32 %s96, 1
        %s178 = scalar_lea.sflag [#allocation4], %s177
        %s179 = sand.u32 %s96, 1
        %s180 = smul.addr %s179, 8
        %s181 = scalar_lea.vmem [#allocation3], %s180
        %s182 = smul.u32 4, %s23
        %s183 = smul.u32 2, %s22
        %p184 = scmp.lt.s32.totalorder %s21, 1
        %s185 = scalar_select %p184, %s21, 1
        %p186 = scmp.lt.s32.totalorder %s182, 3
        %s187 = scalar_select %p186, %s182, 3
        %p188 = scmp.lt.s32.totalorder %s183, 1
        %s189 = scalar_select %p188, %s183, 1
        %s190 = smul.addr %s187, 2
        %s191 = sadd.s32 %s189, %s190
        %s192 = smul.addr %s185, 8
        %s193 = sadd.s32 %s191, %s192
        %s194 = smul.addr %s193, 8
        %s195 = scalar_lea.vmem %s0, %s194
        %s196 = smul.u32 4, %s23
        %s197 = smul.u32 2, %s22
        %p198 = scmp.eq.s32.totalorder %s23, 0
        // Predicated region
        $region29: #{vectorizer_forward.1} parent=27 // pred_check
          %p199 = pneg %p198
        $region30: #{vectorizer_forward.1} parent=27 // pred_check_branch
          %201 = sbr.rel (%p199) target = $region32
        $region31: #{vectorizer_forward.1} parent=27 // pred_region
          %202 = vst [vmem:[#allocation2] sm:$0xff] 0.0
          %203 = vst [vmem:[#allocation2 + $0x8] sm:$0xff] 0.0
        $region32: #{vectorizer_forward.1} parent=27 // pred_fallthru
          _
        %s204 = smul.u32 %s23, 4
        %v205 = vld [vmem:[#allocation2] sm:$0xff]
        %v206 = vld [vmem:[#allocation2 + $0x8] sm:$0xff]
        %v207 = vld [vmem:[%s195] sm:$0xff]
        %v208 = vld [vmem:[%s195 + $0x8] sm:$0xff]
        %s209 = smul.u32 %s204, 16
        %s210 = scalar_lea.vmem %s1, %s209
        %v211 = vld [vmem:[%s210] sm:$0xff]
        %v212 = vld [vmem:[%s210 + $0x8] sm:$0xff]
        %vm213 = vcmask 130048
        %v215 = vsel %vm213, %v207, 0
        %v218 = vsel %vm213, %v208, 0
        %220 = vmatprep.subr.mxu0 0.0
        %221 = vmatpush1.msra.mxu0 %v211
        %222 = vmatprep.subr.mxu0 0.0
        %223 = vmatpush1.msra.mxu0 %v212
        %224 = vmatprep.subr.mxu0 0.0
        %225 = vmatpush1.msra.mxu0 0.0
        %226 = vmatprep.subr.mxu0 0.0
        %227 = vmatpush1.msra.mxu0 0.0
        %228 = vmatprep.subr.mxu0 0.0
        %229 = vmatpush1.msra.mxu0 0.0
        %230 = vmatprep.subr.mxu0 0.0
        %231 = vmatpush1.msra.mxu0 0.0
        %232 = vmatprep.subr.mxu0 0.0
        %233 = vmatpush1.msra.mxu0 0.0
        %234 = vmatprep.subr.mxu0 0.0
        %235 = vmatpush1.msra.mxu0 0.0
        %236 = vmatprep.subr.mxu0 0.0
        %237 = vmatpush1.msra.mxu0 0.0
        %238 = vmatprep.subr.mxu0 0.0
        %239 = vmatpush1.msra.mxu0 0.0
        %240 = vmatprep.subr.mxu0 0.0
        %241 = vmatpush1.msra.mxu0 0.0
        %242 = vmatprep.subr.mxu0 0.0
        %243 = vmatpush1.msra.mxu0 0.0
        %244 = vmatprep.subr.mxu0 0.0
        %245 = vmatpush1.msra.mxu0 0.0
        %246 = vmatprep.subr.mxu0 0.0
        %247 = vmatpush1.msra.mxu0 0.0
        %248 = vmatprep.subr.mxu0 0.0
        %249 = vmatpush1.msra.mxu0 0.0
        %250 = vmatprep.subr.mxu0 0.0
        %251 = vmatpush1.msra.mxu0 0.0
        %252 = vmatprep.subr.mxu0 0.0
        %253 = vmatpush1.msra.mxu0 0.0
        %254 = vmatprep.subr.mxu0 0.0
        %255 = vmatpush1.msra.mxu0 0.0
        %256 = vmatprep.subr.mxu0 0.0
        %257 = vmatpush1.msra.mxu0 0.0
        %258 = vmatprep.subr.mxu0 0.0
        %259 = vmatpush1.msra.mxu0 0.0
        %260 = vmatprep.subr.mxu0 0.0
        %261 = vmatpush1.msra.mxu0 0.0
        %262 = vmatprep.subr.mxu0 0.0
        %263 = vmatpush1.msra.mxu0 0.0
        %264 = vmatprep.subr.mxu0 0.0
        %265 = vmatpush1.msra.mxu0 0.0
        %266 = vmatprep.subr.mxu0 0.0
        %267 = vmatpush1.msra.mxu0 0.0
        %268 = vmatprep.subr.mxu0 0.0
        %269 = vmatpush1.msra.mxu0 0.0
        %270 = vmatprep.subr.mxu0 0.0
        %271 = vmatpush1.msra.mxu0 0.0
        %272 = vmatprep.subr.mxu0 0.0
        %273 = vmatpush1.msra.mxu0 0.0
        %274 = vmatprep.subr.mxu0 0.0
        %275 = vmatpush1.msra.mxu0 0.0
        %276 = vmatprep.subr.mxu0 0.0
        %277 = vmatpush1.msra.mxu0 0.0
        %278 = vmatprep.subr.mxu0 0.0
        %279 = vmatpush1.msra.mxu0 0.0
        %280 = vmatprep.subr.mxu0 0.0
        %281 = vmatpush1.msra.mxu0 0.0
        %282 = vmatprep.subr.mxu0 0.0
        %283 = vmatpush1.msra.mxu0 0.0
        %284 = vmatprep.mubr.f32.mxu0 0.0
        %285 = vmatmul.mubr.f32.gmra.mrb[0].mxu0 %v215
        %v286 = vpop.f32.mrb[0].mxu0
        %v287 = vadd.f32 0.0, %v286
        %v288 = vpop.f32.mrb[0].mxu0
        %289 = vmatprep.mubr.f32.mxu0 0.0
        %290 = vmatmul.mubr.f32.gmra.mrb[0].mxu0 %v218
        %v291 = vpop.f32.mrb[0].mxu0
        %v292 = vadd.f32 0.0, %v291
        %v293 = vpop.f32.mrb[0].mxu0
        %294 = vdwg.mxu0
        %v295 = vadd.f32 %v205, %v287
        %v296 = vadd.f32 %v206, %v292
        %s297 = scalar_lea.vmem %s195, 16
        %v298 = vld [vmem:[%s297] sm:$0xff]
        %v299 = vld [vmem:[%s297 + $0x8] sm:$0xff]
        %s300 = sadd.s32 %s204, 1
        %s301 = smul.u32 %s300, 16
        %s302 = scalar_lea.vmem %s1, %s301
        %v303 = vld [vmem:[%s302] sm:$0xff]
        %v304 = vld [vmem:[%s302 + $0x8] sm:$0xff]
        %v306 = vsel %vm213, %v298, 0
        %v309 = vsel %vm213, %v299, 0
        %311 = vmatprep.subr.mxu0 0.0
        %312 = vmatpush1.msra.mxu0 %v303
        %313 = vmatprep.subr.mxu0 0.0
        %314 = vmatpush1.msra.mxu0 %v304
        %315 = vmatprep.subr.mxu0 0.0
        %316 = vmatpush1.msra.mxu0 0.0
        %317 = vmatprep.subr.mxu0 0.0
        %318 = vmatpush1.msra.mxu0 0.0
        %319 = vmatprep.subr.mxu0 0.0
        %320 = vmatpush1.msra.mxu0 0.0
        %321 = vmatprep.subr.mxu0 0.0
        %322 = vmatpush1.msra.mxu0 0.0
        %323 = vmatprep.subr.mxu0 0.0
        %324 = vmatpush1.msra.mxu0 0.0
        %325 = vmatprep.subr.mxu0 0.0
        %326 = vmatpush1.msra.mxu0 0.0
        %327 = vmatprep.subr.mxu0 0.0
        %328 = vmatpush1.msra.mxu0 0.0
        %329 = vmatprep.subr.mxu0 0.0
        %330 = vmatpush1.msra.mxu0 0.0
        %331 = vmatprep.subr.mxu0 0.0
        %332 = vmatpush1.msra.mxu0 0.0
        %333 = vmatprep.subr.mxu0 0.0
        %334 = vmatpush1.msra.mxu0 0.0
        %335 = vmatprep.subr.mxu0 0.0
        %336 = vmatpush1.msra.mxu0 0.0
        %337 = vmatprep.subr.mxu0 0.0
        %338 = vmatpush1.msra.mxu0 0.0
        %339 = vmatprep.subr.mxu0 0.0
        %340 = vmatpush1.msra.mxu0 0.0
        %341 = vmatprep.subr.mxu0 0.0
        %342 = vmatpush1.msra.mxu0 0.0
        %343 = vmatprep.subr.mxu0 0.0
        %344 = vmatpush1.msra.mxu0 0.0
        %345 = vmatprep.subr.mxu0 0.0
        %346 = vmatpush1.msra.mxu0 0.0
        %347 = vmatprep.subr.mxu0 0.0
        %348 = vmatpush1.msra.mxu0 0.0
        %349 = vmatprep.subr.mxu0 0.0
        %350 = vmatpush1.msra.mxu0 0.0
        %351 = vmatprep.subr.mxu0 0.0
        %352 = vmatpush1.msra.mxu0 0.0
        %353 = vmatprep.subr.mxu0 0.0
        %354 = vmatpush1.msra.mxu0 0.0
        %355 = vmatprep.subr.mxu0 0.0
        %356 = vmatpush1.msra.mxu0 0.0
        %357 = vmatprep.subr.mxu0 0.0
        %358 = vmatpush1.msra.mxu0 0.0
        %359 = vmatprep.subr.mxu0 0.0
        %360 = vmatpush1.msra.mxu0 0.0
        %361 = vmatprep.subr.mxu0 0.0
        %362 = vmatpush1.msra.mxu0 0.0
        %363 = vmatprep.subr.mxu0 0.0
        %364 = vmatpush1.msra.mxu0 0.0
        %365 = vmatprep.subr.mxu0 0.0
        %366 = vmatpush1.msra.mxu0 0.0
        %367 = vmatprep.subr.mxu0 0.0
        %368 = vmatpush1.msra.mxu0 0.0
        %369 = vmatprep.subr.mxu0 0.0
        %370 = vmatpush1.msra.mxu0 0.0
        %371 = vmatprep.subr.mxu0 0.0
        %372 = vmatpush1.msra.mxu0 0.0
        %373 = vmatprep.subr.mxu0 0.0
        %374 = vmatpush1.msra.mxu0 0.0
        %375 = vmatprep.mubr.f32.mxu0 0.0
        %376 = vmatmul.mubr.f32.gmra.mrb[0].mxu0 %v306
        %v377 = vpop.f32.mrb[0].mxu0
        %v378 = vadd.f32 0.0, %v377
        %v379 = vpop.f32.mrb[0].mxu0
        %380 = vmatprep.mubr.f32.mxu0 0.0
        %381 = vmatmul.mubr.f32.gmra.mrb[0].mxu0 %v309
        %v382 = vpop.f32.mrb[0].mxu0
        %v383 = vadd.f32 0.0, %v382
        %v384 = vpop.f32.mrb[0].mxu0
        %385 = vdwg.mxu0
        %v386 = vadd.f32 %v295, %v378
        %v387 = vadd.f32 %v296, %v383
        %s388 = scalar_lea.vmem %s195, 32
        %v389 = vld [vmem:[%s388] sm:$0xff]
        %v390 = vld [vmem:[%s388 + $0x8] sm:$0xff]
        %s391 = sadd.s32 %s204, 2
        %s392 = smul.u32 %s391, 16
        %s393 = scalar_lea.vmem %s1, %s392
        %v394 = vld [vmem:[%s393] sm:$0xff]
        %v395 = vld [vmem:[%s393 + $0x8] sm:$0xff]
        %v397 = vsel %vm213, %v389, 0
        %v400 = vsel %vm213, %v390, 0
        %402 = vmatprep.subr.mxu0 0.0
        %403 = vmatpush1.msra.mxu0 %v394
        %404 = vmatprep.subr.mxu0 0.0
        %405 = vmatpush1.msra.mxu0 %v395
        %406 = vmatprep.subr.mxu0 0.0
        %407 = vmatpush1.msra.mxu0 0.0
        %408 = vmatprep.subr.mxu0 0.0
        %409 = vmatpush1.msra.mxu0 0.0
        %410 = vmatprep.subr.mxu0 0.0
        %411 = vmatpush1.msra.mxu0 0.0
        %412 = vmatprep.subr.mxu0 0.0
        %413 = vmatpush1.msra.mxu0 0.0
        %414 = vmatprep.subr.mxu0 0.0
        %415 = vmatpush1.msra.mxu0 0.0
        %416 = vmatprep.subr.mxu0 0.0
        %417 = vmatpush1.msra.mxu0 0.0
        %418 = vmatprep.subr.mxu0 0.0
        %419 = vmatpush1.msra.mxu0 0.0
        %420 = vmatprep.subr.mxu0 0.0
        %421 = vmatpush1.msra.mxu0 0.0
        %422 = vmatprep.subr.mxu0 0.0
        %423 = vmatpush1.msra.mxu0 0.0
        %424 = vmatprep.subr.mxu0 0.0
        %425 = vmatpush1.msra.mxu0 0.0
        %426 = vmatprep.subr.mxu0 0.0
        %427 = vmatpush1.msra.mxu0 0.0
        %428 = vmatprep.subr.mxu0 0.0
        %429 = vmatpush1.msra.mxu0 0.0
        %430 = vmatprep.subr.mxu0 0.0
        %431 = vmatpush1.msra.mxu0 0.0
        %432 = vmatprep.subr.mxu0 0.0
        %433 = vmatpush1.msra.mxu0 0.0
        %434 = vmatprep.subr.mxu0 0.0
        %435 = vmatpush1.msra.mxu0 0.0
        %436 = vmatprep.subr.mxu0 0.0
        %437 = vmatpush1.msra.mxu0 0.0
        %438 = vmatprep.subr.mxu0 0.0
        %439 = vmatpush1.msra.mxu0 0.0
        %440 = vmatprep.subr.mxu0 0.0
        %441 = vmatpush1.msra.mxu0 0.0
        %442 = vmatprep.subr.mxu0 0.0
        %443 = vmatpush1.msra.mxu0 0.0
        %444 = vmatprep.subr.mxu0 0.0
        %445 = vmatpush1.msra.mxu0 0.0
        %446 = vmatprep.subr.mxu0 0.0
        %447 = vmatpush1.msra.mxu0 0.0
        %448 = vmatprep.subr.mxu0 0.0
        %449 = vmatpush1.msra.mxu0 0.0
        %450 = vmatprep.subr.mxu0 0.0
        %451 = vmatpush1.msra.mxu0 0.0
        %452 = vmatprep.subr.mxu0 0.0
        %453 = vmatpush1.msra.mxu0 0.0
        %454 = vmatprep.subr.mxu0 0.0
        %455 = vmatpush1.msra.mxu0 0.0
        %456 = vmatprep.subr.mxu0 0.0
        %457 = vmatpush1.msra.mxu0 0.0
        %458 = vmatprep.subr.mxu0 0.0
        %459 = vmatpush1.msra.mxu0 0.0
        %460 = vmatprep.subr.mxu0 0.0
        %461 = vmatpush1.msra.mxu0 0.0
        %462 = vmatprep.subr.mxu0 0.0
        %463 = vmatpush1.msra.mxu0 0.0
        %464 = vmatprep.subr.mxu0 0.0
        %465 = vmatpush1.msra.mxu0 0.0
        %466 = vmatprep.mubr.f32.mxu0 0.0
        %467 = vmatmul.mubr.f32.gmra.mrb[0].mxu0 %v397
        %v468 = vpop.f32.mrb[0].mxu0
        %v469 = vadd.f32 0.0, %v468
        %v470 = vpop.f32.mrb[0].mxu0
        %471 = vmatprep.mubr.f32.mxu0 0.0
        %472 = vmatmul.mubr.f32.gmra.mrb[0].mxu0 %v400
        %v473 = vpop.f32.mrb[0].mxu0
        %v474 = vadd.f32 0.0, %v473
        %v475 = vpop.f32.mrb[0].mxu0
        %476 = vdwg.mxu0
        %v477 = vadd.f32 %v386, %v469
        %v478 = vadd.f32 %v387, %v474
        %s479 = scalar_lea.vmem %s195, 48
        %v480 = vld [vmem:[%s479] sm:$0xff]
        %v481 = vld [vmem:[%s479 + $0x8] sm:$0xff]
        %s482 = sadd.s32 %s204, 3
        %s483 = smul.u32 %s482, 16
        %s484 = scalar_lea.vmem %s1, %s483
        %v485 = vld [vmem:[%s484] sm:$0xff]
        %v486 = vld [vmem:[%s484 + $0x8] sm:$0xff]
        %v488 = vsel %vm213, %v480, 0
        %v491 = vsel %vm213, %v481, 0
        %493 = vmatprep.subr.mxu0 0.0
        %494 = vmatpush1.msra.mxu0 %v485
        %495 = vmatprep.subr.mxu0 0.0
        %496 = vmatpush1.msra.mxu0 %v486
        %497 = vmatprep.subr.mxu0 0.0
        %498 = vmatpush1.msra.mxu0 0.0
        %499 = vmatprep.subr.mxu0 0.0
        %500 = vmatpush1.msra.mxu0 0.0
        %501 = vmatprep.subr.mxu0 0.0
        %502 = vmatpush1.msra.mxu0 0.0
        %503 = vmatprep.subr.mxu0 0.0
        %504 = vmatpush1.msra.mxu0 0.0
        %505 = vmatprep.subr.mxu0 0.0
        %506 = vmatpush1.msra.mxu0 0.0
        %507 = vmatprep.subr.mxu0 0.0
        %508 = vmatpush1.msra.mxu0 0.0
        %509 = vmatprep.subr.mxu0 0.0
        %510 = vmatpush1.msra.mxu0 0.0
        %511 = vmatprep.subr.mxu0 0.0
        %512 = vmatpush1.msra.mxu0 0.0
        %513 = vmatprep.subr.mxu0 0.0
        %514 = vmatpush1.msra.mxu0 0.0
        %515 = vmatprep.subr.mxu0 0.0
        %516 = vmatpush1.msra.mxu0 0.0
        %517 = vmatprep.subr.mxu0 0.0
        %518 = vmatpush1.msra.mxu0 0.0
        %519 = vmatprep.subr.mxu0 0.0
        %520 = vmatpush1.msra.mxu0 0.0
        %521 = vmatprep.subr.mxu0 0.0
        %522 = vmatpush1.msra.mxu0 0.0
        %523 = vmatprep.subr.mxu0 0.0
        %524 = vmatpush1.msra.mxu0 0.0
        %525 = vmatprep.subr.mxu0 0.0
        %526 = vmatpush1.msra.mxu0 0.0
        %527 = vmatprep.subr.mxu0 0.0
        %528 = vmatpush1.msra.mxu0 0.0
        %529 = vmatprep.subr.mxu0 0.0
        %530 = vmatpush1.msra.mxu0 0.0
        %531 = vmatprep.subr.mxu0 0.0
        %532 = vmatpush1.msra.mxu0 0.0
        %533 = vmatprep.subr.mxu0 0.0
        %534 = vmatpush1.msra.mxu0 0.0
        %535 = vmatprep.subr.mxu0 0.0
        %536 = vmatpush1.msra.mxu0 0.0
        %537 = vmatprep.subr.mxu0 0.0
        %538 = vmatpush1.msra.mxu0 0.0
        %539 = vmatprep.subr.mxu0 0.0
        %540 = vmatpush1.msra.mxu0 0.0
        %541 = vmatprep.subr.mxu0 0.0
        %542 = vmatpush1.msra.mxu0 0.0
        %543 = vmatprep.subr.mxu0 0.0
        %544 = vmatpush1.msra.mxu0 0.0
        %545 = vmatprep.subr.mxu0 0.0
        %546 = vmatpush1.msra.mxu0 0.0
        %547 = vmatprep.subr.mxu0 0.0
        %548 = vmatpush1.msra.mxu0 0.0
        %549 = vmatprep.subr.mxu0 0.0
        %550 = vmatpush1.msra.mxu0 0.0
        %551 = vmatprep.subr.mxu0 0.0
        %552 = vmatpush1.msra.mxu0 0.0
        %553 = vmatprep.subr.mxu0 0.0
        %554 = vmatpush1.msra.mxu0 0.0
        %555 = vmatprep.subr.mxu0 0.0
        %556 = vmatpush1.msra.mxu0 0.0
        %557 = vmatprep.mubr.f32.mxu0 0.0
        %558 = vmatmul.mubr.f32.gmra.mrb[0].mxu0 %v488
        %v559 = vpop.f32.mrb[0].mxu0
        %v560 = vadd.f32 0.0, %v559
        %v561 = vpop.f32.mrb[0].mxu0
        %562 = vmatprep.mubr.f32.mxu0 0.0
        %563 = vmatmul.mubr.f32.gmra.mrb[0].mxu0 %v491
        %v564 = vpop.f32.mrb[0].mxu0
        %v565 = vadd.f32 0.0, %v564
        %v566 = vpop.f32.mrb[0].mxu0
        %567 = vdwg.mxu0
        %v568 = vadd.f32 %v477, %v560
        %v569 = vadd.f32 %v478, %v565
        %570 = vst [vmem:[#allocation2] sm:$0xff] %v568
        %571 = vst [vmem:[#allocation2 + $0x8] sm:$0xff] %v569
        // Predicated region
        $region33: #{vectorizer_forward.1} parent=27 // pred_check
          %p572 = pneg %p198
        $region34: #{vectorizer_forward.1} parent=27 // pred_check_branch
          %574 = sbr.rel (%p572) target = $region36
        $region35: #{vectorizer_forward.1} parent=27 // pred_region
          %v575 = vld [vmem:[#allocation2] sm:$0xff]
          %v576 = vld [vmem:[#allocation2 + $0x8] sm:$0xff]
          %577 = vxpose.xlu0.b32.start [1/16] %v575, 128
          %578 = vxpose.xlu0.b32.cont [2/16] %v576, 128
          %579 = vxpose.xlu0.b32.cont [3/16] 0.0, 128
          %580 = vxpose.xlu0.b32.cont [4/16] 0.0, 128
          %581 = vxpose.xlu0.b32.cont [5/16] 0.0, 128
          %582 = vxpose.xlu0.b32.cont [6/16] 0.0, 128
          %583 = vxpose.xlu0.b32.cont [7/16] 0.0, 128
          %584 = vxpose.xlu0.b32.cont [8/16] 0.0, 128
          %585 = vxpose.xlu0.b32.cont [9/16] 0.0, 128
          %586 = vxpose.xlu0.b32.cont [10/16] 0.0, 128
          %587 = vxpose.xlu0.b32.cont [11/16] 0.0, 128
          %588 = vxpose.xlu0.b32.cont [12/16] 0.0, 128
          %589 = vxpose.xlu0.b32.cont [13/16] 0.0, 128
          %590 = vxpose.xlu0.b32.cont [14/16] 0.0, 128
          %591 = vxpose.xlu0.b32.cont [15/16] 0.0, 128
          %592 = vxpose.xlu0.b32.end [16/16] 0.0, 128
          %v593 = vpop.trf.xlu0
          %v594 = vpop.trf.xlu0
          %v595 = vpop.trf.xlu0
          %v596 = vpop.trf.xlu0
          %v597 = vpop.trf.xlu0
          %v598 = vpop.trf.xlu0
          %v599 = vpop.trf.xlu0
          %v600 = vpop.trf.xlu0
          %v601 = vpop.trf.xlu0
          %v602 = vpop.trf.xlu0
          %v603 = vpop.trf.xlu0
          %v604 = vpop.trf.xlu0
          %v605 = vpop.trf.xlu0
          %v606 = vpop.trf.xlu0
          %v607 = vpop.trf.xlu0
          %v608 = vpop.trf.xlu0
          %609 = vst.msk [vmem:[%s181] sm:$0xff] %vm213, %v593
        $region36: #{vectorizer_forward.1} parent=27 // pred_fallthru
          _
        %s610 = sand.u32 %s96, 1
        %s611 = scalar_lea.sflag [#allocation4], %s610
        %s612 = sand.u32 %s96, 1
        %s613 = smul.addr %s612, 8
        %s614 = scalar_lea.vmem [#allocation3], %s613
        // Predicated region
        $region37: #{vectorizer_forward.1} parent=27 // pred_check
          %p615 = pneg %p106
        $region38: #{vectorizer_forward.1} parent=27 // pred_check_branch
          %617 = sbr.rel (%p615) target = $region40
        $region39: #{vectorizer_forward.1} parent=27 // pred_region
          %s619 = ssub.s32 128, 128
          %620 = vsyncadd %s611, %s619
          %s621 = sadd.s32 %s22, %s21
          %s622 = smul.addr %s621, 128
          %s623 = scalar_lea.hbm %s2, %s622
          %s625 = sshll.u32 %s614, 4
          %s626 = int_to_ptr.vmem [resolvable:$true] %s625
          %628 = dma.vmem_to_hbm [thread:$0]  %s626, 128, %s623, %s611
        $region40: #{vectorizer_forward.1} parent=27 // pred_fallthru
          _
      $region28: #{vectorizer_forward.1} parent=5 // pred_fallthru
        _
      %p629 = scmp.le.s32.totalorder 2, %s11
      // Predicated region
      $region41: #{vectorizer_forward.1} parent=5 // pred_check
        %p630 = pneg %p629
      $region42: #{vectorizer_forward.1} parent=5 // pred_check_branch
        %632 = sbr.rel (%p630) target = $region44
      $region43: #{vectorizer_forward.1} parent=5 // pred_region
        %s633 = ssub.s32 %s11, 2
        // Predicated region
        $region45: #{vectorizer_forward.1} parent=43 // pred_check
          %p634 = pneg %p112
        $region46: #{vectorizer_forward.1} parent=43 // pred_check_branch
          %636 = sbr.rel (%p634) target = $region48
        $region47: #{vectorizer_forward.1} parent=43 // pred_region
          %s637 = sand.u32 %s97, 1
          %s638 = scalar_lea.sflag [#allocation4], %s637
          %s639 = sand.u32 %s97, 1
          %s640 = smul.addr %s639, 8
          %s641 = scalar_lea.vmem [#allocation3], %s640
          %642 = dma.done %s638, 128
        $region48: #{vectorizer_forward.1} parent=43 // pred_fallthru
          _
      $region44: #{vectorizer_forward.1} parent=5 // pred_fallthru
        _
    $region6: #{vectorizer_forward.1} parent=1 // loop_footer
      %s15 = sadd.s32 1, %s11
    $region7: #{vectorizer_forward.1} parent=1 // loop_footer_branch
      %10 = sbr.rel target = $region3
    $region8: #{vectorizer_forward.1} parent=1 // loop_exit
      _
    %643 = vsyncpa [#allocation4], 1
    %s644 = scalar_lea.sflag [#allocation4], 1
    %645 = vsyncpa %s644, 1

</llo_original>
